<compile_context>
chip_gen: v7x
topology: tpu7x:2x2x1
jax: 0.10.0
libtpu: 0.0.40
codegen_flags: <defaults>
</compile_context>

<pallas_src>
import functools
import math

import jax
import jax.numpy as jnp
from jax import lax
from jax.experimental import pallas as pl
from jax.experimental.pallas import tpu as pltpu


def _downsample_kernel(taps_ref, w6_ref, w3_ref, params_ref, out_ref, *,
                       n_conv, c_in, w_out, has_pool):
    # taps: (6*Cin, TP)  channel groups on sublanes, spatial positions on lanes.
    # Group order: [oe_up, ee, oe, eo, oo, oo_up]
    #   rows [  Cin, 5*Cin) = [ee, oe, eo, oo]  -> 2x2 max-pool operands
    #   rows [3*Cin, 6*Cin) = [eo, oo, oo_up]   -> lane-rolled kw=0 taps
    taps = taps_ref[0]

    # Six "direct" taps -> one MXU matmul, f32 accumulation (BN scale folded
    # into the weights).
    conv = jnp.dot(w6_ref[...], taps, preferred_element_type=jnp.float32)

    # Three kw=0 taps: shift the [eo, oo, oo_up] groups right by one output
    # column; wo==0 positions are the conv's left padding -> zero.  The tile is
    # a whole number of output rows, so (local p) % Wo == wo.
    slab = taps[3 * c_in:, :]                                     # (3*Cin, TP)
    shifted = pltpu.roll(slab, shift=1, axis=1)
    col = lax.broadcasted_iota(jnp.int32, shifted.shape, 1) % w_out
    shifted = jnp.where(col == 0, jnp.zeros_like(shifted), shifted)
    conv = conv + jnp.dot(w3_ref[...], shifted,
                          preferred_element_type=jnp.float32)     # (nConv, TP)

    params = params_ref[...]                  # (nOut, 3) = [scale, shift, alpha]
    shift_c = params[:n_conv, 1:2]            # (nConv, 1) broadcast over lanes
    alpha_c = params[:n_conv, 2:3]
    y_c = conv + shift_c                      # scale already folded into w6/w3
    y_c = jnp.where(y_c >= 0.0, y_c, alpha_c * y_c)               # PReLU
    out_ref[0, :n_conv, :] = y_c.astype(out_ref.dtype)

    if has_pool:
        # MaxPool2d(2,2) == elementwise max over the four phases [ee, oe, eo, oo].
        p0 = taps[1 * c_in:2 * c_in, :]
        p1 = taps[2 * c_in:3 * c_in, :]
        p2 = taps[3 * c_in:4 * c_in, :]
        p3 = taps[4 * c_in:5 * c_in, :]
        pooled = jnp.maximum(jnp.maximum(p0, p1),
                             jnp.maximum(p2, p3)).astype(jnp.float32)  # (Cin, TP)
        scale_p = params[n_conv:, 0:1]
        shift_p = params[n_conv:, 1:2]
        alpha_p = params[n_conv:, 2:3]
        y_p = pooled * scale_p + shift_p
        y_p = jnp.where(y_p >= 0.0, y_p, alpha_p * y_p)
        out_ref[0, n_conv:, :] = y_p.astype(out_ref.dtype)


def downsampling_block(x, conv_w, gamma, beta, run_mean, run_var, prelu_alpha,
                       *, eps=1e-3, compute_dtype=jnp.bfloat16, out_dtype=None,
                       vmem_target_bytes=6 * 1024 * 1024):
    """x: (N, C_in, H, W) NCHW.  Returns (N, nOut, H//2, W//2) NCHW."""
    N, C_in, H, W = x.shape
    nConv = conv_w.shape[0]
    nOut = gamma.shape[0]
    has_pool = C_in < nOut
    assert nConv == (nOut - C_in if has_pool else nOut)
    assert H % 2 == 0 and W % 2 == 0, "kernel requires even H, W (matches cat shapes)"
    Ho, Wo = H // 2, W // 2
    P = Ho * Wo
    if out_dtype is None:
        out_dtype = x.dtype

    # Cast once, up front: bf16 operands halve the dominant HBM traffic.
    xc = x.astype(compute_dtype)

    # --- glue: space-to-depth phase split (1.5x of |x|, vs 2.25x im2col) -------
    # x viewed as (N, Cin, Ho, 2, Wo, 2) is a free reshape; the four stride-2
    # phases plus two row-shifted odd phases supply all nine 3x3/s2 taps (the
    # three kw=0 taps are recovered in-kernel with a lane roll).
    xr = xc.reshape(N, C_in, Ho, 2, Wo, 2)
    ee = xr[:, :, :, 0, :, 0]                       # x[2h,   2w  ]
    eo = xr[:, :, :, 0, :, 1]                       # x[2h,   2w+1]
    oe = xr[:, :, :, 1, :, 0]                       # x[2h+1, 2w  ]
    oo = xr[:, :, :, 1, :, 1]                       # x[2h+1, 2w+1]
    zrow = jnp.zeros((N, C_in, 1, Wo), compute_dtype)
    oe_up = jnp.concatenate([zrow, oe[:, :, :-1, :]], axis=2)   # x[2h-1, 2w  ]
    oo_up = jnp.concatenate([zrow, oo[:, :, :-1, :]], axis=2)   # x[2h-1, 2w+1]
    taps6 = jnp.stack([oe_up, ee, oe, eo, oo, oo_up], axis=1)   # (N,6,Cin,Ho,Wo)
    taps6 = taps6.reshape(N, 6 * C_in, P)           # contiguous merges: free

    # --- fused inference-BN parameters ------------------------------------------
    scale = (gamma / jnp.sqrt(run_var + eps)).astype(jnp.float32)
    shift = (beta - run_mean * scale).astype(jnp.float32)
    alpha = prelu_alpha.astype(jnp.float32)
    params = jnp.stack([scale, shift, alpha], axis=1)            # (nOut, 3) f32

    # Weights reordered to match the tap-group layout; BN scale folded in.
    wf = conv_w.astype(jnp.float32)                              # (nConv,Cin,3,3)
    order6 = [(0, 1), (1, 1), (2, 1), (1, 2), (2, 2), (0, 2)]    # [oe_up,ee,oe,eo,oo,oo_up]
    order3 = [(1, 0), (2, 0), (0, 0)]                            # rolled [eo,oo,oo_up]
    w6 = jnp.concatenate([wf[:, :, kh, kw] for kh, kw in order6], axis=1)
    w3 = jnp.concatenate([wf[:, :, kh, kw] for kh, kw in order3], axis=1)
    w6 = (w6 * scale[:nConv, None]).astype(compute_dtype)        # (nConv, 6*Cin)
    w3 = (w3 * scale[:nConv, None]).astype(compute_dtype)        # (nConv, 3*Cin)

    # --- spatial tiling: whole output rows, lane-dense P ------------------------
    in_dsize = jnp.dtype(compute_dtype).itemsize
    out_dsize = jnp.dtype(out_dtype).itemsize
    bytes_per_row = (6 * C_in * in_dsize + nOut * out_dsize) * Wo
    th = min(Ho, max(1, int(vmem_target_bytes // max(bytes_per_row, 1))))
    if th < Ho:
        step = 128 // math.gcd(128, Wo)       # th*Wo must be a multiple of 128
        th = (th // step) * step
        if th == 0:
            th = Ho                           # fall back: whole image per step
        else:
            for cand in range(th, 0, -step):  # prefer an even division of Ho
                if Ho % cand == 0:
                    th = cand
                    break
    tp = th * Wo                              # == P when th == Ho (always legal)
    grid_p = pl.cdiv(Ho, th)

    kernel = functools.partial(_downsample_kernel, n_conv=nConv, c_in=C_in,
                               w_out=Wo, has_pool=has_pool)

    out = pl.pallas_call(
        kernel,
        out_shape=jax.ShapeDtypeStruct((N, nOut, P), out_dtype),
        grid=(N, grid_p),
        in_specs=[
            pl.BlockSpec((1, 6 * C_in, tp), lambda n, p: (n, 0, p)),
            pl.BlockSpec((nConv, 6 * C_in), lambda n, p: (0, 0)),
            pl.BlockSpec((nConv, 3 * C_in), lambda n, p: (0, 0)),
            pl.BlockSpec((nOut, 3), lambda n, p: (0, 0)),
        ],
        out_specs=pl.BlockSpec((1, nOut, tp), lambda n, p: (n, 0, p)),
        compiler_params=pltpu.CompilerParams(
            dimension_semantics=("parallel", "parallel"),
            vmem_limit_bytes=48 * 1024 * 1024),
    )(taps6, w6, w3, params)

    # (N, nOut, P) is already NC(HW): a free reshape, no transpose.
    return out.reshape(N, nOut, Ho, Wo)


def _reference(x, conv_w, gamma, beta, run_mean, run_var, prelu_alpha, eps=1e-3):
    """Pure-JAX reference matching the PyTorch module in eval mode."""
    y = lax.conv_general_dilated(
        x, conv_w, window_strides=(2, 2), padding=((1, 1), (1, 1)),
        dimension_numbers=("NCHW", "OIHW", "NCHW"))
    if x.shape[1] < gamma.shape[0]:
        mp = lax.reduce_window(x, -jnp.inf, lax.max, (1, 1, 2, 2), (1, 1, 2, 2),
                               "VALID")
        y = jnp.concatenate([y, mp], axis=1)
    scale = gamma / jnp.sqrt(run_var + eps)
    shift = beta - run_mean * scale
    y = y * scale[None, :, None, None] + shift[None, :, None, None]
    a = prelu_alpha[None, :, None, None]
    return jnp.where(y >= 0.0, y, a * y)


if __name__ == "__main__":
    key = jax.random.PRNGKey(0)
    N, nIn, nOut, H, W = 2, 4, 8, 16, 16
    nConv = nOut - nIn if nIn < nOut else nOut

    k1, k2, k3 = jax.random.split(key, 3)
    x = jax.random.normal(k1, (N, nIn, H, W), jnp.float32)
    conv_w = jax.random.normal(k2, (nConv, nIn, 3, 3), jnp.float32) * 0.1

    # BatchNorm2d(nOut, eps=1e-3) parameters / running stats (inference mode).
    gamma = 1.0 + 0.1 * jnp.arange(nOut, dtype=jnp.float32)
    beta = 0.05 * jnp.arange(nOut, dtype=jnp.float32)
    run_mean = 0.01 * jax.random.normal(k3, (nOut,), jnp.float32)
    run_var = 0.5 + 0.1 * jnp.arange(nOut, dtype=jnp.float32)
    # nn.PReLU(nOut) default init.
    prelu_alpha = jnp.full((nOut,), 0.25, jnp.float32)

    ref = _reference(x, conv_w, gamma, beta, run_mean, run_var, prelu_alpha)

    # f32 operands (exact path).
    out = downsampling_block(x, conv_w, gamma, beta, run_mean, run_var,
                             prelu_alpha, compute_dtype=jnp.float32)
    jax.block_until_ready(out)
    assert out.shape == (N, nOut, H // 2, W // 2)
    assert jnp.allclose(out, ref, atol=1e-4, rtol=1e-4), float(
        jnp.max(jnp.abs(out - ref)))

    # bf16 operands + bf16 output (default fast path; f32 accumulation, f32
    # BN/PReLU math) — tolerance reflects bf16 rounding of operands/output.
    out_bf16 = downsampling_block(x, conv_w, gamma, beta, run_mean, run_var,
                                  prelu_alpha, compute_dtype=jnp.bfloat16,
                                  out_dtype=jnp.bfloat16)
    jax.block_until_ready(out_bf16)
    out_bf16_f32 = out_bf16.astype(jnp.float32)
    assert jnp.allclose(out_bf16_f32, ref, atol=1e-1, rtol=2e-2), float(
        jnp.max(jnp.abs(out_bf16_f32 - ref)))

    # nIn >= nOut branch (no max-pool concat).
    nIn2 = nOut2 = 8
    xb = jax.random.normal(k1, (N, nIn2, H, W), jnp.float32)
    wb = jax.random.normal(k2, (nOut2, nIn2, 3, 3), jnp.float32) * 0.1
    g2 = jnp.ones((nOut2,), jnp.float32)
    b2 = jnp.zeros((nOut2,), jnp.float32)
    m2 = jnp.zeros((nOut2,), jnp.float32)
    v2 = jnp.ones((nOut2,), jnp.float32)
    a2 = jnp.full((nOut2,), 0.25, jnp.float32)
    ref2 = _reference(xb, wb, g2, b2, m2, v2, a2)
    out2 = downsampling_block(xb, wb, g2, b2, m2, v2, a2,
                              compute_dtype=jnp.float32)
    jax.block_until_ready(out2)
    assert jnp.allclose(out2, ref2, atol=1e-4, rtol=1e-4), float(
        jnp.max(jnp.abs(out2 - ref2)))

    print("KERNEL_OK")
</pallas_src>

<mosaic_0001>
module attributes {stable_mosaic.version = 11 : i64} {
  func.func @_downsample_kernel(%arg0: i32, %arg1: i32, %arg2: memref<1x24x64xf32, #tpu.memory_space<vmem>>, %arg3: memref<4x24xf32, #tpu.memory_space<vmem>>, %arg4: memref<4x12xf32, #tpu.memory_space<vmem>>, %arg5: memref<8x3xf32, #tpu.memory_space<vmem>>, %arg6: memref<1x8x64xf32, #tpu.memory_space<vmem>>) attributes {dimension_semantics = [#tpu.dimension_semantics<parallel>, #tpu.dimension_semantics<parallel>], iteration_bounds = array<i64: 2, 1>, scalar_prefetch = 0 : i64, scratch_operands = 0 : i64, tpu.core_type = #tpu.core_type<tc>, window_params = [{transform_indices = @transform_0, window_bounds = array<i64: 1, 24, 64>}, {pipeline_mode = #tpu.pipeline_mode<synchronous>, transform_indices = @transform_1, window_bounds = array<i64: 4, 24>}, {pipeline_mode = #tpu.pipeline_mode<synchronous>, transform_indices = @transform_2, window_bounds = array<i64: 4, 12>}, {pipeline_mode = #tpu.pipeline_mode<synchronous>, transform_indices = @transform_3, window_bounds = array<i64: 8, 3>}, {transform_indices = @transform_4, window_bounds = array<i64: 1, 8, 64>}]} {
    %c0 = arith.constant 0 : index
    %c0_0 = arith.constant 0 : index
    %c0_1 = arith.constant 0 : index
    %0 = vector.load %arg2[%c0, %c0_0, %c0_1] : memref<1x24x64xf32, #tpu.memory_space<vmem>>, vector<1x24x64xf32>
    %1 = vector.shape_cast %0 : vector<1x24x64xf32> to vector<24x64xf32>
    %c0_2 = arith.constant 0 : index
    %c0_3 = arith.constant 0 : index
    %2 = vector.load %arg3[%c0_2, %c0_3] : memref<4x24xf32, #tpu.memory_space<vmem>>, vector<4x24xf32>
    %cst = arith.constant dense<0.000000e+00> : vector<4x64xf32>
    %3 = tpu.matmul %2, %1, %cst {dimension_numbers = #tpu.dot_dimension_numbers<[1], [0], [0], [1], [0, 0, 1, 1], [], []>} : vector<4x24xf32>, vector<24x64xf32>, vector<4x64xf32> -> vector<4x64xf32>
    %4 = vector.extract_strided_slice %1 {offsets = [12, 0], sizes = [12, 64], strides = [1, 1]} : vector<24x64xf32> to vector<12x64xf32>
    %c1_i32 = arith.constant 1 : i32
    %5 = tpu.dynamic_rotate %4 by %c1_i32 dim 1 : vector<12x64xf32>, i32 -> vector<12x64xf32>
    %6 = tpu.iota {dimensions = array<i32: 1>} : vector<12x64xi32>
    %c8_i32 = arith.constant 8 : i32
    %c0_i32 = arith.constant 0 : i32
    %7 = arith.cmpi eq, %c8_i32, %c0_i32 : i32
    %c1_i32_4 = arith.constant 1 : i32
    %8 = arith.select %7, %c1_i32_4, %c8_i32 : i32
    %9 = vector.broadcast %8 : i32 to vector<12x64xi32>
    %10 = arith.remsi %6, %9 : vector<12x64xi32>
    %c0_i32_5 = arith.constant 0 : i32
    %11 = vector.broadcast %c0_i32_5 : i32 to vector<12x64xi32>
    %12 = arith.cmpi ne, %10, %11 : vector<12x64xi32>
    %c0_i32_6 = arith.constant 0 : i32
    %13 = vector.broadcast %c0_i32_6 : i32 to vector<12x64xi32>
    %14 = arith.cmpi slt, %10, %13 : vector<12x64xi32>
    %c0_i32_7 = arith.constant 0 : i32
    %15 = arith.cmpi slt, %8, %c0_i32_7 : i32
    %16 = vector.broadcast %15 : i1 to vector<12x64xi1>
    %17 = vector.broadcast %16 : vector<12x64xi1> to vector<12x64xi1>
    %18 = arith.xori %14, %17 : vector<12x64xi1>
    %19 = arith.andi %18, %12 : vector<12x64xi1>
    %20 = vector.broadcast %8 : i32 to vector<12x64xi32>
    %21 = arith.addi %10, %20 : vector<12x64xi32>
    %22 = arith.select %19, %21, %10 : vector<12x64xi1>, vector<12x64xi32>
    %c0_i32_8 = arith.constant 0 : i32
    %23 = vector.broadcast %c0_i32_8 : i32 to vector<12x64xi32>
    %24 = arith.cmpi eq, %22, %23 : vector<12x64xi32>
    %cst_9 = arith.constant 0.000000e+00 : f32
    %25 = vector.broadcast %cst_9 : f32 to vector<12x64xf32>
    %26 = arith.select %24, %25, %5 : vector<12x64xi1>, vector<12x64xf32>
    %c0_10 = arith.constant 0 : index
    %c0_11 = arith.constant 0 : index
    %27 = vector.load %arg4[%c0_10, %c0_11] : memref<4x12xf32, #tpu.memory_space<vmem>>, vector<4x12xf32>
    %cst_12 = arith.constant dense<0.000000e+00> : vector<4x64xf32>
    %28 = tpu.matmul %27, %26, %cst_12 {dimension_numbers = #tpu.dot_dimension_numbers<[1], [0], [0], [1], [0, 0, 1, 1], [], []>} : vector<4x12xf32>, vector<12x64xf32>, vector<4x64xf32> -> vector<4x64xf32>
    %29 = arith.addf %3, %28 : vector<4x64xf32>
    %c0_13 = arith.constant 0 : index
    %c0_14 = arith.constant 0 : index
    %30 = vector.load %arg5[%c0_13, %c0_14] : memref<8x3xf32, #tpu.memory_space<vmem>>, vector<8x3xf32>
    %31 = vector.extract_strided_slice %30 {offsets = [0, 1], sizes = [4, 1], strides = [1, 1]} : vector<8x3xf32> to vector<4x1xf32>
    %32 = vector.extract_strided_slice %30 {offsets = [0, 2], sizes = [4, 1], strides = [1, 1]} : vector<8x3xf32> to vector<4x1xf32>
    %33 = vector.broadcast %31 : vector<4x1xf32> to vector<4x64xf32>
    %34 = arith.addf %29, %33 : vector<4x64xf32>
    %cst_15 = arith.constant 0.000000e+00 : f32
    %35 = vector.broadcast %cst_15 : f32 to vector<4x64xf32>
    %36 = arith.cmpf oge, %34, %35 : vector<4x64xf32>
    %37 = vector.broadcast %32 : vector<4x1xf32> to vector<4x64xf32>
    %38 = arith.mulf %37, %34 : vector<4x64xf32>
    %39 = arith.select %36, %34, %38 : vector<4x64xi1>, vector<4x64xf32>
    %c0_16 = arith.constant 0 : index
    %c0_17 = arith.constant 0 : index
    %c0_18 = arith.constant 0 : index
    %40 = vector.load %arg6[%c0_16, %c0_17, %c0_18] : memref<1x8x64xf32, #tpu.memory_space<vmem>>, vector<1x4x64xf32>
    %41 = vector.shape_cast %40 : vector<1x4x64xf32> to vector<4x64xf32>
    %42 = vector.shape_cast %39 : vector<4x64xf32> to vector<1x4x64xf32>
    tpu.vector_store %arg6[%c0_16, %c0_17, %c0_18], %42 {strides = array<i32>} : memref<1x8x64xf32, #tpu.memory_space<vmem>>, vector<1x4x64xf32>,
    %43 = vector.extract_strided_slice %1 {offsets = [4, 0], sizes = [4, 64], strides = [1, 1]} : vector<24x64xf32> to vector<4x64xf32>
    %44 = vector.extract_strided_slice %1 {offsets = [8, 0], sizes = [4, 64], strides = [1, 1]} : vector<24x64xf32> to vector<4x64xf32>
    %45 = vector.extract_strided_slice %1 {offsets = [12, 0], sizes = [4, 64], strides = [1, 1]} : vector<24x64xf32> to vector<4x64xf32>
    %46 = vector.extract_strided_slice %1 {offsets = [16, 0], sizes = [4, 64], strides = [1, 1]} : vector<24x64xf32> to vector<4x64xf32>
    %47 = arith.maximumf %43, %44 : vector<4x64xf32>
    %48 = arith.maximumf %45, %46 : vector<4x64xf32>
    %49 = arith.maximumf %47, %48 : vector<4x64xf32>
    %50 = vector.extract_strided_slice %30 {offsets = [4, 0], sizes = [4, 1], strides = [1, 1]} : vector<8x3xf32> to vector<4x1xf32>
    %51 = vector.extract_strided_slice %30 {offsets = [4, 1], sizes = [4, 1], strides = [1, 1]} : vector<8x3xf32> to vector<4x1xf32>
    %52 = vector.extract_strided_slice %30 {offsets = [4, 2], sizes = [4, 1], strides = [1, 1]} : vector<8x3xf32> to vector<4x1xf32>
    %53 = vector.broadcast %50 : vector<4x1xf32> to vector<4x64xf32>
    %54 = arith.mulf %49, %53 : vector<4x64xf32>
    %55 = vector.broadcast %51 : vector<4x1xf32> to vector<4x64xf32>
    %56 = arith.addf %54, %55 : vector<4x64xf32>
    %cst_19 = arith.constant 0.000000e+00 : f32
    %57 = vector.broadcast %cst_19 : f32 to vector<4x64xf32>
    %58 = arith.cmpf oge, %56, %57 : vector<4x64xf32>
    %59 = vector.broadcast %52 : vector<4x1xf32> to vector<4x64xf32>
    %60 = arith.mulf %59, %56 : vector<4x64xf32>
    %61 = arith.select %58, %56, %60 : vector<4x64xi1>, vector<4x64xf32>
    %c0_20 = arith.constant 0 : index
    %c4 = arith.constant 4 : index
    %c0_21 = arith.constant 0 : index
    %62 = vector.load %arg6[%c0_20, %c4, %c0_21] : memref<1x8x64xf32, #tpu.memory_space<vmem>>, vector<1x4x64xf32>
    %63 = vector.shape_cast %62 : vector<1x4x64xf32> to vector<4x64xf32>
    %64 = vector.shape_cast %61 : vector<4x64xf32> to vector<1x4x64xf32>
    tpu.vector_store %arg6[%c0_20, %c4, %c0_21], %64 {strides = array<i32>} : memref<1x8x64xf32, #tpu.memory_space<vmem>>, vector<1x4x64xf32>,
    return
  }
  func.func @transform_0(%arg0: i32, %arg1: i32) -> (i32, i32, i32) {
    %c0_i32 = arith.constant 0 : i32
    %c0_i32_0 = arith.constant 0 : i32
    return %arg0, %c0_i32, %arg1 : i32, i32, i32
  }
  func.func @transform_1(%arg0: i32, %arg1: i32) -> (i32, i32) {
    %c0_i32 = arith.constant 0 : i32
    %c0_i32_0 = arith.constant 0 : i32
    %c0_i32_1 = arith.constant 0 : i32
    return %c0_i32, %c0_i32_0 : i32, i32
  }
  func.func @transform_2(%arg0: i32, %arg1: i32) -> (i32, i32) {
    %c0_i32 = arith.constant 0 : i32
    %c0_i32_0 = arith.constant 0 : i32
    %c0_i32_1 = arith.constant 0 : i32
    return %c0_i32, %c0_i32_0 : i32, i32
  }
  func.func @transform_3(%arg0: i32, %arg1: i32) -> (i32, i32) {
    %c0_i32 = arith.constant 0 : i32
    %c0_i32_0 = arith.constant 0 : i32
    %c0_i32_1 = arith.constant 0 : i32
    return %c0_i32, %c0_i32_0 : i32, i32
  }
  func.func @transform_4(%arg0: i32, %arg1: i32) -> (i32, i32, i32) {
    %c0_i32 = arith.constant 0 : i32
    %c0_i32_0 = arith.constant 0 : i32
    return %arg0, %c0_i32, %arg1 : i32, i32, i32
  }
}

</mosaic_0001>

<llo_original>
// kernel: tpu_custom_call.1
$region0: #{tpu_custom_call.1}
  #allocation0 [shape = 'u32[]', space=smem, size = 0x4, offset = 0x4, fixed_abs, tag = 'smem constant byte address 0x4 - core index']
  #allocation1 [shape = 'u32[144,128]{1,0:T(1,128)}', space=vmem, size = 0x12000, scoped, tag = 'internal scratch']
  %s0 = inlined_call_operand.hbm [shape: f32[2,24,64], index: 0, kind: input, shape index: {}]
  %s1 = inlined_call_operand.vmem [shape: f32[4,24], index: 1, kind: input, shape index: {}]
  %s2 = inlined_call_operand.vmem [shape: f32[4,12], index: 2, kind: input, shape index: {}]
  %s3 = inlined_call_operand.vmem [shape: f32[8,3], index: 3, kind: input, shape index: {}]
  %s4 = inlined_call_operand.hbm [shape: f32[2,8,64], index: 4, kind: output, shape index: {}]
  %s5 = sld [smem:[#allocation0]]
  $region53: #{tpu_custom_call.1} parent=0
    _
  %s7 = ssub.s32 1, %s5
  %s8 = scalar_select 0, %s7, %s5
  $region1: #{tpu_custom_call.1} parent=0
    #allocation2 [shape = 'u8[24576]{0}', space=vmem, size = 0x6000, scoped, tag = 'input window, operand 0']
    #allocation3 [shape = 's32[2]{0}', space=sflag, size = 0x8, scoped, tag = 'scoped memory for tpu_custom_call.1']
    #allocation4 [shape = 's32[2]{0}', space=sflag, size = 0x8, scoped, tag = 'scoped memory for tpu_custom_call.1']
    #allocation5 [shape = 'u8[8192]{0}', space=vmem, size = 0x2000, scoped, tag = 'output window, operand 0']
    %9 = vsyncpa [#allocation3], 0
    %s10 = scalar_lea.sflag [#allocation3], 1
    %11 = vsyncpa %s10, 0
    %12 = vsyncpa [#allocation4], 0
    %s13 = scalar_lea.sflag [#allocation4], 1
    %14 = vsyncpa %s13, 0
    loop: start=0, step=1, limit=4
    $region2: #{tpu_custom_call.1} parent=1 // loop_pre_header
      _
    $region3: #{tpu_custom_call.1} parent=1 // loop_header
      %s16 = sphi 0, %s20
      %p17 = scmp.ge.s32.totalorder %s16, 4
      %s23 = sphi 0, %s35
      %s24 = sphi 0, %s31
      %s25 = sphi 0, %s23
      %s26 = sphi 0, %s24
      %s27 = sphi 0, %s25
      %s28 = sphi 0, %s26
      %s40 = sphi 0, %s42
      %s43 = sphi 0, %s40
      %s44 = sphi 0, %s43
      %s60 = sphi 0, %s44
      %s64 = sphi 0, %s64
      %s66 = sphi 0, %s64
      %s67 = sphi 0, %s66
      %s81 = sphi 0, %s67
      %s85 = sphi 0, %s85
      %s87 = sphi 0, %s85
      %s88 = sphi 0, %s87
      %s102 = sphi 0, %s88
      %s106 = sphi 0, %s106
      %s108 = sphi 0, %s106
      %s109 = sphi 0, %s108
      %s123 = sphi 0, %s109
      %s131 = sphi 0, %s133
      %s134 = sphi 0, %s131
      %s135 = sphi 0, %s134
      %s151 = sphi 0, %s135
    $region4: #{tpu_custom_call.1} parent=1 // loop_header_branch
      %19 = sbr.rel (%p17) target = $region8
    $region5: #{tpu_custom_call.1} parent=1 // loop_body
      %s21 = ssub.s32 %s16, 1
      %s22 = ssub.s32 %s16, 2
      %s29 = sadd.s32 1, %s24
      %p30 = scmp.ge.s32.totalorder %s29, 1
      %s31 = scalar_select %p30, 0, %s29
      %s32 = sadd.s32 1, %s23
      %s33 = scalar_select %p30, %s32, %s23
      %p34 = scmp.ge.s32.totalorder %s33, 2
      %s35 = scalar_select %p34, 0, %s33
      %s36 = ssub.s32 %s23, %s35
      %s37 = ssub.s32 %s24, %s31
      %s38 = sor.u32 %s36, %s37
      %p39 = scmp.eq.s32.totalorder %s38, 0
      %s41 = sadd.s32 %s40, 1
      %s42 = scalar_select %p39, %s40, %s41
      %p45 = pneg %p39
      %p46 = scmp.eq.s32.totalorder %s16, 1
      %p47 = por %p45, %p46
      %p48 = scmp.ne.s32.totalorder %s40, %s43
      %p49 = scmp.eq.s32.totalorder %s16, 0
      %p50 = por %p48, %p49
      %p51 = scmp.ne.s32.totalorder %s40, %s43
      %p52 = scmp.eq.s32.totalorder %s21, 1
      %p53 = por %p51, %p52
      %p54 = scmp.ne.s32.totalorder %s43, %s44
      %p55 = scmp.eq.s32.totalorder %s21, 0
      %p56 = por %p54, %p55
      %p57 = scmp.ne.s32.totalorder %s43, %s44
      %p58 = scmp.eq.s32.totalorder %s22, 1
      %p59 = por %p57, %p58
      %p61 = scmp.ne.s32.totalorder %s44, %s60
      %p62 = scmp.eq.s32.totalorder %s22, 0
      %p63 = por %p61, %p62
      %s65 = sadd.s32 %s64, 1
      %p68 = scmp.eq.s32.totalorder %s16, 1
      %p69 = scmp.ne.s32.totalorder %s64, %s66
      %p70 = scmp.eq.s32.totalorder %s16, 0
      %p71 = por %p69, %p70
      %p72 = scmp.ne.s32.totalorder %s64, %s66
      %p73 = scmp.eq.s32.totalorder %s21, 1
      %p74 = por %p72, %p73
      %p75 = scmp.ne.s32.totalorder %s66, %s67
      %p76 = scmp.eq.s32.totalorder %s21, 0
      %p77 = por %p75, %p76
      %p78 = scmp.ne.s32.totalorder %s66, %s67
      %p79 = scmp.eq.s32.totalorder %s22, 1
      %p80 = por %p78, %p79
      %p82 = scmp.ne.s32.totalorder %s67, %s81
      %p83 = scmp.eq.s32.totalorder %s22, 0
      %p84 = por %p82, %p83
      %s86 = sadd.s32 %s85, 1
      %p89 = scmp.eq.s32.totalorder %s16, 1
      %p90 = scmp.ne.s32.totalorder %s85, %s87
      %p91 = scmp.eq.s32.totalorder %s16, 0
      %p92 = por %p90, %p91
      %p93 = scmp.ne.s32.totalorder %s85, %s87
      %p94 = scmp.eq.s32.totalorder %s21, 1
      %p95 = por %p93, %p94
      %p96 = scmp.ne.s32.totalorder %s87, %s88
      %p97 = scmp.eq.s32.totalorder %s21, 0
      %p98 = por %p96, %p97
      %p99 = scmp.ne.s32.totalorder %s87, %s88
      %p100 = scmp.eq.s32.totalorder %s22, 1
      %p101 = por %p99, %p100
      %p103 = scmp.ne.s32.totalorder %s88, %s102
      %p104 = scmp.eq.s32.totalorder %s22, 0
      %p105 = por %p103, %p104
      %s107 = sadd.s32 %s106, 1
      %p110 = scmp.eq.s32.totalorder %s16, 1
      %p111 = scmp.ne.s32.totalorder %s106, %s108
      %p112 = scmp.eq.s32.totalorder %s16, 0
      %p113 = por %p111, %p112
      %p114 = scmp.ne.s32.totalorder %s106, %s108
      %p115 = scmp.eq.s32.totalorder %s21, 1
      %p116 = por %p114, %p115
      %p117 = scmp.ne.s32.totalorder %s108, %s109
      %p118 = scmp.eq.s32.totalorder %s21, 0
      %p119 = por %p117, %p118
      %p120 = scmp.ne.s32.totalorder %s108, %s109
      %p121 = scmp.eq.s32.totalorder %s22, 1
      %p122 = por %p120, %p121
      %p124 = scmp.ne.s32.totalorder %s109, %s123
      %p125 = scmp.eq.s32.totalorder %s22, 0
      %p126 = por %p124, %p125
      %s127 = ssub.s32 %s23, %s35
      %s128 = ssub.s32 %s24, %s31
      %s129 = sor.u32 %s127, %s128
      %p130 = scmp.eq.s32.totalorder %s129, 0
      %s132 = sadd.s32 %s131, 1
      %s133 = scalar_select %p130, %s131, %s132
      %p136 = pneg %p130
      %p137 = scmp.eq.s32.totalorder %s16, 1
      %p138 = por %p136, %p137
      %p139 = scmp.ne.s32.totalorder %s131, %s134
      %p140 = scmp.eq.s32.totalorder %s16, 0
      %p141 = por %p139, %p140
      %p142 = scmp.ne.s32.totalorder %s131, %s134
      %p143 = scmp.eq.s32.totalorder %s21, 1
      %p144 = por %p142, %p143
      %p145 = scmp.ne.s32.totalorder %s134, %s135
      %p146 = scmp.eq.s32.totalorder %s21, 0
      %p147 = por %p145, %p146
      %p148 = scmp.ne.s32.totalorder %s134, %s135
      %p149 = scmp.eq.s32.totalorder %s22, 1
      %p150 = por %p148, %p149
      %p152 = scmp.ne.s32.totalorder %s135, %s151
      %p153 = scmp.eq.s32.totalorder %s22, 0
      %p154 = por %p152, %p153
      %p155 = scmp.le.s32.totalorder 1, %s16
      %p156 = scmp.lt.s32.totalorder %s16, 3
      %p157 = pnand %p155, %p156
      %p158 = pneg %p157
      // Predicated region
      $region9: #{tpu_custom_call.1} parent=5 // pred_check
        _
      $region10: #{tpu_custom_call.1} parent=5 // pred_check_branch
        %160 = sbr.rel (%p157) target = $region12
      $region11: #{tpu_custom_call.1} parent=5 // pred_region
        %s161 = ssub.s32 %s16, 1
        // Predicated region
        $region13: #{tpu_custom_call.1} parent=11 // pred_check
          %p162 = pneg %p77
        $region14: #{tpu_custom_call.1} parent=11 // pred_check_branch
          %164 = sbr.rel (%p162) target = $region16
        $region15: #{tpu_custom_call.1} parent=11 // pred_region
          _
        $region16: #{tpu_custom_call.1} parent=11 // pred_fallthru
          _
        // Predicated region
        $region17: #{tpu_custom_call.1} parent=11 // pred_check
          %p165 = pneg %p98
        $region18: #{tpu_custom_call.1} parent=11 // pred_check_branch
          %167 = sbr.rel (%p165) target = $region20
        $region19: #{tpu_custom_call.1} parent=11 // pred_region
          _
        $region20: #{tpu_custom_call.1} parent=11 // pred_fallthru
          _
        // Predicated region
        $region21: #{tpu_custom_call.1} parent=11 // pred_check
          %p168 = pneg %p119
        $region22: #{tpu_custom_call.1} parent=11 // pred_check_branch
          %170 = sbr.rel (%p168) target = $region24
        $region23: #{tpu_custom_call.1} parent=11 // pred_region
          _
        $region24: #{tpu_custom_call.1} parent=11 // pred_fallthru
          _
      $region12: #{tpu_custom_call.1} parent=5 // pred_fallthru
        _
      %p171 = scmp.lt.s32.totalorder %s16, 2
      // Predicated region
      $region25: #{tpu_custom_call.1} parent=5 // pred_check
        %p172 = pneg %p171
      $region26: #{tpu_custom_call.1} parent=5 // pred_check_branch
        %174 = sbr.rel (%p172) target = $region28
      $region27: #{tpu_custom_call.1} parent=5 // pred_region
        // Predicated region
        $region29: #{tpu_custom_call.1} parent=27 // pred_check
          %p175 = pneg %p50
        $region30: #{tpu_custom_call.1} parent=27 // pred_check_branch
          %177 = sbr.rel (%p175) target = $region32
        $region31: #{tpu_custom_call.1} parent=27 // pred_region
          %s178 = sand.u32 %s40, 1
          %s179 = scalar_lea.sflag [#allocation3], %s178
          %s180 = sand.u32 %s40, 1
          %s181 = smul.addr %s180, 24
          %s182 = scalar_lea.vmem [#allocation2], %s181
          %s184 = ssub.s32 384, 384
          %185 = vsyncadd %s179, %s184
          %s186 = smul.addr %s23, 3
          %s187 = sadd.s32 %s24, %s186
          %s188 = smul.addr %s187, 128
          %s189 = scalar_lea.hbm %s0, %s188
          %s190 = sshll.u32 %s182, 4
          %s191 = int_to_ptr.vmem [resolvable:$true] %s190
          %196 = dma.hbm_to_vmem [thread:$0]  %s189, 384, %s191, %s179, 128, 128, 8
        $region32: #{tpu_custom_call.1} parent=27 // pred_fallthru
          _
      $region28: #{tpu_custom_call.1} parent=5 // pred_fallthru
        _
      %p197 = scmp.le.s32.totalorder 1, %s16
      %p198 = scmp.lt.s32.totalorder %s16, 3
      %p199 = pnand %p197, %p198
      %p200 = pneg %p199
      // Predicated region
      $region33: #{tpu_custom_call.1} parent=5 // pred_check
        _
      $region34: #{tpu_custom_call.1} parent=5 // pred_check_branch
        %202 = sbr.rel (%p199) target = $region36
      $region35: #{tpu_custom_call.1} parent=5 // pred_region
        %s203 = ssub.s32 %s16, 1
        %s204 = sand.u32 %s43, 1
        %s205 = scalar_lea.sflag [#allocation3], %s204
        %s206 = sand.u32 %s43, 1
        %s207 = smul.addr %s206, 24
        %s208 = scalar_lea.vmem [#allocation2], %s207
        // Predicated region
        $region37: #{tpu_custom_call.1} parent=35 // pred_check
          %p209 = pneg %p56
        $region38: #{tpu_custom_call.1} parent=35 // pred_check_branch
          %211 = sbr.rel (%p209) target = $region40
        $region39: #{tpu_custom_call.1} parent=35 // pred_region
          %212 = dma.done %s205, 384
        $region40: #{tpu_custom_call.1} parent=35 // pred_fallthru
          _
        %s213 = sand.u32 %s43, 1
        %s214 = scalar_lea.sflag [#allocation3], %s213
        %s215 = sand.u32 %s43, 1
        %s216 = smul.addr %s215, 24
        %s217 = scalar_lea.vmem [#allocation2], %s216
        %p218 = pneg %p56
        %p219 = pneg %p53
        %p220 = pneg %p77
        %p221 = pneg %p74
        %p222 = pneg %p98
        %p223 = pneg %p95
        %p224 = pneg %p119
        %p225 = pneg %p116
        %p226 = pneg %p147
        %p227 = pneg %p144
        %s228 = sand.u32 %s134, 1
        %s229 = scalar_lea.sflag [#allocation4], %s228
        %s230 = sand.u32 %s134, 1
        %s231 = smul.addr %s230, 8
        %s232 = scalar_lea.vmem [#allocation5], %s231
        %v233 = vld [vmem:[%s208] sm:$0xff]
        %v234 = vld [vmem:[%s208 + $0x8] sm:$0xff]
        %v235 = vld [vmem:[%s208 + $0x10] sm:$0xff]
        %v236 = vld [vmem:[%s1] sm:$0xf]
        %vm239 = vcmask 1043456
        %v240 = vrot.slane %v234, 4
        %v241 = vrot.slane %v235, 4
        %v242 = vsel %vm239, %v240, %v241
        %vm245 = vcmask 1048064
        %246 = vrot.lane.b32.xlu0 %v242, 64
        %v247 = vpop.permute.xlu0 %246
        %v248 = vsel %vm245, %v247, %v242
        %249 = vrot.lane.b32.xlu0 %v241, 64
        %v250 = vpop.permute.xlu0 %249
        %v251 = vsel %vm245, %v250, %v241
        %252 = vrot.lane.b32.xlu0 %v248, 64
        %v253 = vpop.permute.xlu0 %252
        %254 = vrot.lane.b32.xlu0 %v251, 64
        %v255 = vpop.permute.xlu0 %254
        %v256 = vsel %vm245, %v253, %v242
        %v257 = vsel %vm245, %v255, %v241
        %v258 = vlaneseq
        %v259 = vand.u32 %v258, 127
        %vm260 = vcmp.lt.s32.totalorder %v259, 0
        %v261 = vsub.s32 0, %v259
        %v262 = vsel %vm260, %v261, %v259
        %v263 = vshrl.u32 %v262, 3
        %v264 = vand.u32 %v262, 7
        %v265 = vsub.s32 0, %v264
        %v266 = vsel %vm260, %v265, %v264
        %vm267 = vcmp.ne.s32.totalorder %v266, 0
        %vm268 = vcmp.lt.s32.totalorder %v266, 0
        %vm269 = vmand %vm268, %vm267
        %v270 = vadd.s32 %v266, 8
        %v271 = vsel %vm269, %v270, %v266
        %vm272 = vcmp.eq.s32.totalorder %v271, 0
        %275 = vrot.lane.b32.xlu0 %v256, 65
        %v276 = vpop.permute.xlu0 %275
        %277 = vrot.lane.b32.xlu0 %v257, 65
        %v278 = vpop.permute.xlu0 %277
        %v281 = vsel %vm272, 0.0, %v276
        %v282 = vsel %vm272, 0.0, %v278
        %v283 = vld [vmem:[%s2] sm:$0xf]
        %vm284 = vcmask 97280
        %v286 = vsel %vm284, %v283, 0
        %v289 = vsel %vm239, %v282, 0
        %291 = vmatprep.subr.mxu0 0.0
        %292 = vmatpush1.msra.mxu0 %v281
        %293 = vmatprep.subr.mxu0 0.0
        %294 = vmatpush1.msra.mxu0 %v289
        %295 = vmatprep.subr.mxu0 0.0
        %296 = vmatpush1.msra.mxu0 0.0
        %297 = vmatprep.subr.mxu0 0.0
        %298 = vmatpush1.msra.mxu0 0.0
        %299 = vmatprep.subr.mxu0 0.0
        %300 = vmatpush1.msra.mxu0 0.0
        %301 = vmatprep.subr.mxu0 0.0
        %302 = vmatpush1.msra.mxu0 0.0
        %303 = vmatprep.subr.mxu0 0.0
        %304 = vmatpush1.msra.mxu0 0.0
        %305 = vmatprep.subr.mxu0 0.0
        %306 = vmatpush1.msra.mxu0 0.0
        %307 = vmatprep.subr.mxu0 0.0
        %308 = vmatpush1.msra.mxu0 0.0
        %309 = vmatprep.subr.mxu0 0.0
        %310 = vmatpush1.msra.mxu0 0.0
        %311 = vmatprep.subr.mxu0 0.0
        %312 = vmatpush1.msra.mxu0 0.0
        %313 = vmatprep.subr.mxu0 0.0
        %314 = vmatpush1.msra.mxu0 0.0
        %315 = vmatprep.subr.mxu0 0.0
        %316 = vmatpush1.msra.mxu0 0.0
        %317 = vmatprep.subr.mxu0 0.0
        %318 = vmatpush1.msra.mxu0 0.0
        %319 = vmatprep.subr.mxu0 0.0
        %320 = vmatpush1.msra.mxu0 0.0
        %321 = vmatprep.subr.mxu0 0.0
        %322 = vmatpush1.msra.mxu0 0.0
        %323 = vmatprep.subr.mxu0 0.0
        %324 = vmatpush1.msra.mxu0 0.0
        %325 = vmatprep.subr.mxu0 0.0
        %326 = vmatpush1.msra.mxu0 0.0
        %327 = vmatprep.subr.mxu0 0.0
        %328 = vmatpush1.msra.mxu0 0.0
        %329 = vmatprep.subr.mxu0 0.0
        %330 = vmatpush1.msra.mxu0 0.0
        %331 = vmatprep.subr.mxu0 0.0
        %332 = vmatpush1.msra.mxu0 0.0
        %333 = vmatprep.subr.mxu0 0.0
        %334 = vmatpush1.msra.mxu0 0.0
        %335 = vmatprep.subr.mxu0 0.0
        %336 = vmatpush1.msra.mxu0 0.0
        %337 = vmatprep.subr.mxu0 0.0
        %338 = vmatpush1.msra.mxu0 0.0
        %339 = vmatprep.subr.mxu0 0.0
        %340 = vmatpush1.msra.mxu0 0.0
        %341 = vmatprep.subr.mxu0 0.0
        %342 = vmatpush1.msra.mxu0 0.0
        %343 = vmatprep.subr.mxu0 0.0
        %344 = vmatpush1.msra.mxu0 0.0
        %345 = vmatprep.subr.mxu0 0.0
        %346 = vmatpush1.msra.mxu0 0.0
        %347 = vmatprep.subr.mxu0 0.0
        %348 = vmatpush1.msra.mxu0 0.0
        %349 = vmatprep.subr.mxu0 0.0
        %350 = vmatpush1.msra.mxu0 0.0
        %351 = vmatprep.subr.mxu0 0.0
        %352 = vmatpush1.msra.mxu0 0.0
        %353 = vmatprep.subr.mxu0 0.0
        %354 = vmatpush1.msra.mxu0 0.0
        %355 = vmatprep.mubr.f32.mxu0 0.0
        %356 = vmatmul.mubr.f32.gmra.mrb[0].mxu0 %v286
        %v357 = vpop.f32.mrb[0].mxu0
        %v358 = vadd.f32 0.0, %v357
        %v359 = vpop.f32.mrb[0].mxu0
        %360 = vdwg.mxu0
        %vm361 = vcmask 195584
        %v363 = vsel %vm361, %v236, 0
        %365 = vmatprep.subr.mxu0 0.0
        %366 = vmatpush1.msra.mxu0 %v233
        %367 = vmatprep.subr.mxu0 0.0
        %368 = vmatpush1.msra.mxu0 %v234
        %369 = vmatprep.subr.mxu0 0.0
        %370 = vmatpush1.msra.mxu0 %v235
        %371 = vmatprep.subr.mxu0 0.0
        %372 = vmatpush1.msra.mxu0 0.0
        %373 = vmatprep.subr.mxu0 0.0
        %374 = vmatpush1.msra.mxu0 0.0
        %375 = vmatprep.subr.mxu0 0.0
        %376 = vmatpush1.msra.mxu0 0.0
        %377 = vmatprep.subr.mxu0 0.0
        %378 = vmatpush1.msra.mxu0 0.0
        %379 = vmatprep.subr.mxu0 0.0
        %380 = vmatpush1.msra.mxu0 0.0
        %381 = vmatprep.subr.mxu0 0.0
        %382 = vmatpush1.msra.mxu0 0.0
        %383 = vmatprep.subr.mxu0 0.0
        %384 = vmatpush1.msra.mxu0 0.0
        %385 = vmatprep.subr.mxu0 0.0
        %386 = vmatpush1.msra.mxu0 0.0
        %387 = vmatprep.subr.mxu0 0.0
        %388 = vmatpush1.msra.mxu0 0.0
        %389 = vmatprep.subr.mxu0 0.0
        %390 = vmatpush1.msra.mxu0 0.0
        %391 = vmatprep.subr.mxu0 0.0
        %392 = vmatpush1.msra.mxu0 0.0
        %393 = vmatprep.subr.mxu0 0.0
        %394 = vmatpush1.msra.mxu0 0.0
        %395 = vmatprep.subr.mxu0 0.0
        %396 = vmatpush1.msra.mxu0 0.0
        %397 = vmatprep.subr.mxu0 0.0
        %398 = vmatpush1.msra.mxu0 0.0
        %399 = vmatprep.subr.mxu0 0.0
        %400 = vmatpush1.msra.mxu0 0.0
        %401 = vmatprep.subr.mxu0 0.0
        %402 = vmatpush1.msra.mxu0 0.0
        %403 = vmatprep.subr.mxu0 0.0
        %404 = vmatpush1.msra.mxu0 0.0
        %405 = vmatprep.subr.mxu0 0.0
        %406 = vmatpush1.msra.mxu0 0.0
        %407 = vmatprep.subr.mxu0 0.0
        %408 = vmatpush1.msra.mxu0 0.0
        %409 = vmatprep.subr.mxu0 0.0
        %410 = vmatpush1.msra.mxu0 0.0
        %411 = vmatprep.subr.mxu0 0.0
        %412 = vmatpush1.msra.mxu0 0.0
        %413 = vmatprep.subr.mxu0 0.0
        %414 = vmatpush1.msra.mxu0 0.0
        %415 = vmatprep.subr.mxu0 0.0
        %416 = vmatpush1.msra.mxu0 0.0
        %417 = vmatprep.subr.mxu0 0.0
        %418 = vmatpush1.msra.mxu0 0.0
        %419 = vmatprep.subr.mxu0 0.0
        %420 = vmatpush1.msra.mxu0 0.0
        %421 = vmatprep.subr.mxu0 0.0
        %422 = vmatpush1.msra.mxu0 0.0
        %423 = vmatprep.subr.mxu0 0.0
        %424 = vmatpush1.msra.mxu0 0.0
        %425 = vmatprep.subr.mxu0 0.0
        %426 = vmatpush1.msra.mxu0 0.0
        %427 = vmatprep.subr.mxu0 0.0
        %428 = vmatpush1.msra.mxu0 0.0
        %429 = vmatprep.mubr.f32.mxu0 0.0
        %430 = vmatmul.mubr.f32.gmra.mrb[0].mxu0 %v363
        %v431 = vpop.f32.mrb[0].mxu0
        %v432 = vadd.f32 %v358, %v431
        %v433 = vpop.f32.mrb[0].mxu0
        %434 = vdwg.mxu0
        %v435 = vld [vmem:[%s3] sm:$0xff]
        %437 = vset.pattern.permute.xlu0 1
        %438 = vperm.xlu0 %437, %v435
        %v439 = vpop.permute.xlu0 %438
        %v441 = vadd.f32 %v432, %v439
        %vm442 = vcmp.ge.f32.partialorder %v441, 0.0
        %443 = vset.pattern.permute.xlu0 2
        %444 = vperm.xlu0 %443, %v435
        %v445 = vpop.permute.xlu0 %444
        %v447 = vmul.f32 %v445, %v441
        %v448 = vsel %vm442, %v441, %v447
        %vm449 = vcmask 519168
        %450 = vst.msk [vmem:[%s232] sm:$0xf] %vm449, %v448
        %v452 = vmax.f32 %v233, %v240
        %v453 = vmax.f32 %v234, %v241
        %v454 = vmax.f32 %v452, %v453
        %455 = vset.pattern.permute.xlu0 0
        %456 = vperm.xlu0 %455, %v435
        %v457 = vpop.permute.xlu0 %456
        %v459 = vmul.f32 %v454, %v457
        %v460 = vadd.f32 %v459, %v439
        %vm461 = vcmp.ge.f32.partialorder %v460, 0.0
        %v462 = vmul.f32 %v445, %v460
        %v463 = vsel %vm461, %v460, %v462
        %vm464 = vcmask 523268
        %465 = vst.msk [vmem:[%s232] sm:$0xf0] %vm464, %v463
        %s466 = sand.u32 %s134, 1
        %s467 = scalar_lea.sflag [#allocation4], %s466
        %s468 = sand.u32 %s134, 1
        %s469 = smul.addr %s468, 8
        %s470 = scalar_lea.vmem [#allocation5], %s469
        // Predicated region
        $region41: #{tpu_custom_call.1} parent=35 // pred_check
          %p471 = pneg %p144
        $region42: #{tpu_custom_call.1} parent=35 // pred_check_branch
          %473 = sbr.rel (%p471) target = $region44
        $region43: #{tpu_custom_call.1} parent=35 // pred_region
          %s475 = ssub.s32 128, 128
          %476 = vsyncadd %s467, %s475
          %s477 = sadd.s32 %s26, %s25
          %s478 = smul.addr %s477, 128
          %s479 = scalar_lea.hbm %s4, %s478
          %s481 = sshll.u32 %s470, 4
          %s482 = int_to_ptr.vmem [resolvable:$true] %s481
          %484 = dma.vmem_to_hbm [thread:$0]  %s482, 128, %s479, %s467
        $region44: #{tpu_custom_call.1} parent=35 // pred_fallthru
          _
      $region36: #{tpu_custom_call.1} parent=5 // pred_fallthru
        _
      %p485 = scmp.le.s32.totalorder 2, %s16
      // Predicated region
      $region45: #{tpu_custom_call.1} parent=5 // pred_check
        %p486 = pneg %p485
      $region46: #{tpu_custom_call.1} parent=5 // pred_check_branch
        %488 = sbr.rel (%p486) target = $region48
      $region47: #{tpu_custom_call.1} parent=5 // pred_region
        %s489 = ssub.s32 %s16, 2
        // Predicated region
        $region49: #{tpu_custom_call.1} parent=47 // pred_check
          %p490 = pneg %p150
        $region50: #{tpu_custom_call.1} parent=47 // pred_check_branch
          %492 = sbr.rel (%p490) target = $region52
        $region51: #{tpu_custom_call.1} parent=47 // pred_region
          %s493 = sand.u32 %s135, 1
          %s494 = scalar_lea.sflag [#allocation4], %s493
          %s495 = sand.u32 %s135, 1
          %s496 = smul.addr %s495, 8
          %s497 = scalar_lea.vmem [#allocation5], %s496
          %498 = dma.done %s494, 128
        $region52: #{tpu_custom_call.1} parent=47 // pred_fallthru
          _
      $region48: #{tpu_custom_call.1} parent=5 // pred_fallthru
        _
    $region6: #{tpu_custom_call.1} parent=1 // loop_footer
      %s20 = sadd.s32 1, %s16
    $region7: #{tpu_custom_call.1} parent=1 // loop_footer_branch
      %15 = sbr.rel target = $region3
    $region8: #{tpu_custom_call.1} parent=1 // loop_exit
      _
    %499 = vsyncpa [#allocation3], 1
    %s500 = scalar_lea.sflag [#allocation3], 1
    %501 = vsyncpa %s500, 1
    %502 = vsyncpa [#allocation4], 1
    %s503 = scalar_lea.sflag [#allocation4], 1
    %504 = vsyncpa %s503, 1

</llo_original>
